<compile_context>
chip_gen: v5e
topology: v5e:2x2
jax: 0.10.0
libtpu: 0.0.40
codegen_flags: <defaults>
</compile_context>

<pallas_src>
import jax
import jax.numpy as jnp
import numpy as np
from jax.experimental import pallas as pl
from jax.experimental.pallas import tpu as pltpu


def _bilinear_matrix(n_out: int, n_in: int) -> jnp.ndarray:
    """Interpolation matrix R (n_out, n_in) s.t. y = R @ x is the
    align_corners=True bilinear resize of x along one axis.  Rows sum to 1."""
    if n_in == 1:
        return jnp.ones((n_out, 1), jnp.float32)
    if n_out == 1:
        return jnp.zeros((1, n_in), jnp.float32).at[0, 0].set(1.0)
    i = jnp.arange(n_out, dtype=jnp.float32)
    src = i * (n_in - 1) / (n_out - 1)
    f = jnp.clip(jnp.floor(src).astype(jnp.int32), 0, n_in - 2)
    t = src - f.astype(jnp.float32)
    rows = jnp.arange(n_out)
    r = jnp.zeros((n_out, n_in), jnp.float32)
    r = r.at[rows, f].add(1.0 - t)
    r = r.at[rows, f + 1].add(t)
    return r


def _pick_channel_block(c: int, max_block: int = 256) -> int:
    """Largest channel block <= max_block that tiles C (multiple of 8 if < C)."""
    if c <= max_block:
        return c
    for d in range(max_block, 0, -1):
        if c % d == 0 and d % 8 == 0:
            return d
    return c


def _pick_spatial_block(hw_in: int, max_block: int = 16384) -> int:
    """Lane tile over the flattened input spatial axis.  Full extent when small
    or not 128-divisible; otherwise the largest 128-multiple divisor <= max."""
    if hw_in <= max_block or hw_in % 128 != 0:
        return hw_in
    blk = (max_block // 128) * 128
    while blk > 128 and hw_in % blk != 0:
        blk -= 128
    return blk if hw_in % blk == 0 else hw_in


def _conv_upsample_kernel(x_ref, w_ref, shift_ref, r_ref, out_ref, acc_ref):
    # x_ref:     (C, s_blk)         VMEM, input-channel slab for this spatial tile
    # w_ref:     (c_blk, C)         VMEM, 1x1 conv weight with BN scale folded
    # shift_ref: (c_blk, 1)         VMEM, folded BN shift
    # r_ref:     (s_blk, hw_out)    VMEM, joint (H,W) bilinear resize matrix tile
    # out_ref:   (c_blk, hw_out)    VMEM, lane-dense output slab
    # acc_ref:   (c_blk, hw_out)    VMEM f32 accumulator across the spatial axis
    sb = pl.program_id(2)

    @pl.when(sb == 0)
    def _():
        acc_ref[...] = jnp.zeros_like(acc_ref)

    # 1x1 conv (+ BN scale folded into w) at input resolution: one MXU matmul.
    z = jnp.dot(w_ref[...], x_ref[...], preferred_element_type=jnp.float32)
    # Folded BN shift; commutes with the resize because columns of R sum to 1.
    z = z + shift_ref[...]

    # Joint H+W bilinear resize: one lane-dense MXU matmul, accumulated.
    acc_ref[...] += jnp.dot(z.astype(r_ref.dtype), r_ref[...],
                            preferred_element_type=jnp.float32)

    @pl.when(sb == pl.num_programs(2) - 1)
    def _():
        out_ref[...] = acc_ref[...].astype(out_ref.dtype)


def conv_upsample_forward(x, target_hw, conv_w, bn_gamma, bn_beta, bn_mean,
                          bn_var, eps=1e-5, max_channel_block=256,
                          operand_dtype=jnp.float32):
    """Equivalent of conv_upsample.forward(x, target) with target spatial size
    `target_hw`.  Returns x unchanged if spatial sizes already match."""
    N, C, Hin, Win = x.shape
    Hout, Wout = target_hw
    if (Hin, Win) == (Hout, Wout):
        return x

    rh = _bilinear_matrix(Hout, Hin)                       # (Hout, Hin)
    rw = _bilinear_matrix(Wout, Win)                       # (Wout, Win)
    # Joint resize: up_flat = x_flat @ R with R = kron(rh, rw).T, columns sum to 1.
    r = jnp.kron(rh, rw).T.astype(operand_dtype)           # (Hin*Win, Hout*Wout)

    scale = bn_gamma / jnp.sqrt(bn_var + eps)              # (C,)
    w_scaled = (conv_w * scale[:, None]).astype(operand_dtype)   # BN scale folded
    shift = (bn_beta - bn_mean * scale).reshape(C, 1).astype(jnp.float32)

    hw_in, hw_out = Hin * Win, Hout * Wout
    c_blk = _pick_channel_block(C, max_channel_block)
    s_blk = _pick_spatial_block(hw_in)
    n_cb, n_sb = C // c_blk, hw_in // s_blk

    x_flat = x.reshape(N, C, hw_in).astype(operand_dtype)  # layout-preserving

    out = pl.pallas_call(
        _conv_upsample_kernel,
        out_shape=jax.ShapeDtypeStruct((N, C, hw_out), x.dtype),
        grid=(N, n_cb, n_sb),
        in_specs=[
            pl.BlockSpec((pl.Squeezed(), C, s_blk), lambda n, cb, sb: (n, 0, sb)),
            pl.BlockSpec((c_blk, C), lambda n, cb, sb: (cb, 0)),
            pl.BlockSpec((c_blk, 1), lambda n, cb, sb: (cb, 0)),
            pl.BlockSpec((s_blk, hw_out), lambda n, cb, sb: (sb, 0)),
        ],
        out_specs=pl.BlockSpec((pl.Squeezed(), c_blk, hw_out),
                               lambda n, cb, sb: (n, cb, 0)),
        scratch_shapes=[pltpu.VMEM((c_blk, hw_out), jnp.float32)],
        compiler_params=pltpu.CompilerParams(
            dimension_semantics=("parallel", "parallel", "arbitrary"),
            vmem_limit_bytes=48 * 1024 * 1024),
    )(x_flat, w_scaled, shift, r)

    return out.reshape(N, C, Hout, Wout)


def _reference(x, target_hw, conv_w, gamma, beta, mean, var, eps=1e-5):
    Hout, Wout = target_hw
    N, C, Hin, Win = x.shape
    if (Hin, Win) == (Hout, Wout):
        return x
    rh = _bilinear_matrix(Hout, Hin)
    rw = _bilinear_matrix(Wout, Win)
    up = jnp.einsum("hH,wW,ncHW->nchw", rh, rw, x)
    y = jnp.einsum("oc,nchw->nohw", conv_w, up)
    scale = gamma / jnp.sqrt(var + eps)
    shift = beta - mean * scale
    return y * scale[None, :, None, None] + shift[None, :, None, None]


if __name__ == "__main__":
    key = jax.random.PRNGKey(0)
    k_x, k_w, k_g, k_b, k_m, k_v = jax.random.split(key, 6)

    N, C = 2, 4
    Hin, Win = 8, 8
    Hout, Wout = 16, 16          # target spatial size

    x = jax.random.normal(k_x, (N, C, Hin, Win), jnp.float32)
    target = jax.random.normal(key, (N, C, Hout, Wout), jnp.float32)

    # Deterministic parameters (Conv2d(C, C, 1, bias=False) + BatchNorm2d(C)).
    conv_w = jax.random.normal(k_w, (C, C), jnp.float32) * 0.1   # (out_ch, in_ch)
    bn_gamma = 1.0 + 0.1 * jax.random.normal(k_g, (C,), jnp.float32)
    bn_beta = 0.1 * jax.random.normal(k_b, (C,), jnp.float32)
    bn_mean = 0.1 * jax.random.normal(k_m, (C,), jnp.float32)
    bn_var = jnp.abs(jax.random.normal(k_v, (C,), jnp.float32)) + 0.5

    out = conv_upsample_forward(x, target.shape[2:], conv_w, bn_gamma, bn_beta,
                                bn_mean, bn_var)
    out = jax.block_until_ready(out)

    ref = _reference(x, target.shape[2:], conv_w, bn_gamma, bn_beta, bn_mean,
                     bn_var)
    np.testing.assert_allclose(np.asarray(out), np.asarray(ref),
                               rtol=1e-4, atol=1e-4)

    # Pass-through case (spatial sizes already match) should return x as-is,
    # matching the PyTorch module (conv+BN skipped when no resize is needed).
    same = conv_upsample_forward(target, target.shape[2:], conv_w, bn_gamma,
                                 bn_beta, bn_mean, bn_var)
    np.testing.assert_allclose(np.asarray(same), np.asarray(target))

    print("KERNEL_OK")
</pallas_src>

<mosaic_0001>
module attributes {stable_mosaic.version = 11 : i64} {
  func.func @_conv_upsample_kernel(%arg0: i32, %arg1: i32, %arg2: i32, %arg3: memref<1x4x64xf32, #tpu.memory_space<vmem>>, %arg4: memref<4x4xf32, #tpu.memory_space<vmem>>, %arg5: memref<4x1xf32, #tpu.memory_space<vmem>>, %arg6: memref<64x256xf32, #tpu.memory_space<vmem>>, %arg7: memref<1x4x256xf32, #tpu.memory_space<vmem>>, %arg8: memref<4x256xf32, #tpu.memory_space<vmem>>) attributes {dimension_semantics = [#tpu.dimension_semantics<parallel>, #tpu.dimension_semantics<parallel>, #tpu.dimension_semantics<arbitrary>], iteration_bounds = array<i64: 2, 1, 1>, scalar_prefetch = 0 : i64, scratch_operands = 1 : i64, tpu.core_type = #tpu.core_type<tc>, window_params = [{transform_indices = @transform_0, window_bounds = array<i64: 1, 4, 64>}, {transform_indices = @transform_1, window_bounds = array<i64: 4, 4>}, {transform_indices = @transform_2, window_bounds = array<i64: 4, 1>}, {transform_indices = @transform_3, window_bounds = array<i64: 64, 256>}, {transform_indices = @transform_4, window_bounds = array<i64: 1, 4, 256>}]} {
    %c0_i32 = arith.constant 0 : i32
    %0 = arith.cmpi eq, %arg2, %c0_i32 : i32
    %1 = arith.extui %0 : i1 to i32
    %c0_i32_0 = arith.constant 0 : i32
    %2 = arith.cmpi ne, %1, %c0_i32_0 : i32
    scf.if %2 {
      %cst_16 = arith.constant 0.000000e+00 : f32
      %18 = vector.broadcast %cst_16 : f32 to vector<4x256xf32>
      %c0_17 = arith.constant 0 : index
      %c0_18 = arith.constant 0 : index
      %19 = vector.load %arg8[%c0_17, %c0_18] : memref<4x256xf32, #tpu.memory_space<vmem>>, vector<4x256xf32>
      tpu.vector_store %arg8[%c0_17, %c0_18], %18 {strides = array<i32>} : memref<4x256xf32, #tpu.memory_space<vmem>>, vector<4x256xf32>,
    } else {
    }
    %c0 = arith.constant 0 : index
    %c0_1 = arith.constant 0 : index
    %3 = vector.load %arg4[%c0, %c0_1] : memref<4x4xf32, #tpu.memory_space<vmem>>, vector<4x4xf32>
    %c0_2 = arith.constant 0 : index
    %c0_3 = arith.constant 0 : index
    %c0_4 = arith.constant 0 : index
    %4 = vector.load %arg3[%c0_2, %c0_3, %c0_4] : memref<1x4x64xf32, #tpu.memory_space<vmem>>, vector<1x4x64xf32>
    %5 = vector.shape_cast %4 : vector<1x4x64xf32> to vector<4x64xf32>
    %cst = arith.constant dense<0.000000e+00> : vector<4x64xf32>
    %6 = tpu.matmul %3, %5, %cst {dimension_numbers = #tpu.dot_dimension_numbers<[1], [0], [0], [1], [0, 0, 1, 1], [], []>} : vector<4x4xf32>, vector<4x64xf32>, vector<4x64xf32> -> vector<4x64xf32>
    %c0_5 = arith.constant 0 : index
    %c0_6 = arith.constant 0 : index
    %7 = vector.load %arg5[%c0_5, %c0_6] : memref<4x1xf32, #tpu.memory_space<vmem>>, vector<4x1xf32>
    %8 = vector.broadcast %7 : vector<4x1xf32> to vector<4x64xf32>
    %9 = arith.addf %6, %8 : vector<4x64xf32>
    %c0_7 = arith.constant 0 : index
    %c0_8 = arith.constant 0 : index
    %10 = vector.load %arg8[%c0_7, %c0_8] : memref<4x256xf32, #tpu.memory_space<vmem>>, vector<4x256xf32>
    %c0_9 = arith.constant 0 : index
    %c0_10 = arith.constant 0 : index
    %11 = vector.load %arg6[%c0_9, %c0_10] : memref<64x256xf32, #tpu.memory_space<vmem>>, vector<64x256xf32>
    %cst_11 = arith.constant dense<0.000000e+00> : vector<4x256xf32>
    %12 = tpu.matmul %9, %11, %cst_11 {dimension_numbers = #tpu.dot_dimension_numbers<[1], [0], [0], [1], [0, 0, 1, 1], [], []>} : vector<4x64xf32>, vector<64x256xf32>, vector<4x256xf32> -> vector<4x256xf32>
    %13 = arith.addf %10, %12 : vector<4x256xf32>
    %c0_12 = arith.constant 0 : index
    %c0_13 = arith.constant 0 : index
    %14 = vector.load %arg8[%c0_12, %c0_13] : memref<4x256xf32, #tpu.memory_space<vmem>>, vector<4x256xf32>
    tpu.vector_store %arg8[%c0_12, %c0_13], %13 {strides = array<i32>} : memref<4x256xf32, #tpu.memory_space<vmem>>, vector<4x256xf32>,
    %c0_i32_14 = arith.constant 0 : i32
    %15 = arith.cmpi eq, %arg2, %c0_i32_14 : i32
    %16 = arith.extui %15 : i1 to i32
    %c0_i32_15 = arith.constant 0 : i32
    %17 = arith.cmpi ne, %16, %c0_i32_15 : i32
    scf.if %17 {
      %c0_16 = arith.constant 0 : index
      %c0_17 = arith.constant 0 : index
      %18 = vector.load %arg8[%c0_16, %c0_17] : memref<4x256xf32, #tpu.memory_space<vmem>>, vector<4x256xf32>
      %c0_18 = arith.constant 0 : index
      %c0_19 = arith.constant 0 : index
      %c0_20 = arith.constant 0 : index
      %19 = vector.load %arg7[%c0_18, %c0_19, %c0_20] : memref<1x4x256xf32, #tpu.memory_space<vmem>>, vector<1x4x256xf32>
      %20 = vector.shape_cast %19 : vector<1x4x256xf32> to vector<4x256xf32>
      %21 = vector.shape_cast %18 : vector<4x256xf32> to vector<1x4x256xf32>
      tpu.vector_store %arg7[%c0_18, %c0_19, %c0_20], %21 {strides = array<i32>} : memref<1x4x256xf32, #tpu.memory_space<vmem>>, vector<1x4x256xf32>,
    } else {
    }
    return
  }
  func.func @transform_0(%arg0: i32, %arg1: i32, %arg2: i32) -> (i32, i32, i32) {
    %c0_i32 = arith.constant 0 : i32
    %c0_i32_0 = arith.constant 0 : i32
    return %arg0, %c0_i32, %arg2 : i32, i32, i32
  }
  func.func @transform_1(%arg0: i32, %arg1: i32, %arg2: i32) -> (i32, i32) {
    %c0_i32 = arith.constant 0 : i32
    %c0_i32_0 = arith.constant 0 : i32
    return %arg1, %c0_i32 : i32, i32
  }
  func.func @transform_2(%arg0: i32, %arg1: i32, %arg2: i32) -> (i32, i32) {
    %c0_i32 = arith.constant 0 : i32
    %c0_i32_0 = arith.constant 0 : i32
    return %arg1, %c0_i32 : i32, i32
  }
  func.func @transform_3(%arg0: i32, %arg1: i32, %arg2: i32) -> (i32, i32) {
    %c0_i32 = arith.constant 0 : i32
    %c0_i32_0 = arith.constant 0 : i32
    return %arg2, %c0_i32 : i32, i32
  }
  func.func @transform_4(%arg0: i32, %arg1: i32, %arg2: i32) -> (i32, i32, i32) {
    %c0_i32 = arith.constant 0 : i32
    %c0_i32_0 = arith.constant 0 : i32
    return %arg0, %arg1, %c0_i32 : i32, i32, i32
  }
}

</mosaic_0001>

<llo_original>
// kernel: tpu_custom_call.1
$region0: #{tpu_custom_call.1}
  #allocation0 [shape = 'u32[]', space=smem, size = 0x4, offset = 0x4, fixed_abs, tag = 'smem constant byte address 0x4 - core index']
  #allocation1 [shape = 'u32[72,128]{1,0:T(1,128)}', space=vmem, size = 0x9000, scoped, tag = 'internal scratch']
  #allocation2 [shape = 'f32[4,256]{1,0:T(4,128)}', space=vmem, size = 0x1000, scoped, tag = 'scratch operand']
  %s0 = inlined_call_operand.hbm [shape: f32[2,4,64], index: 0, kind: input, shape index: {}]
  %s1 = inlined_call_operand.vmem [shape: f32[4,4], index: 1, kind: input, shape index: {}]
  %s2 = inlined_call_operand.vmem [shape: f32[4,1], index: 2, kind: input, shape index: {}]
  %s3 = inlined_call_operand.hbm [shape: f32[64,256], index: 3, kind: input, shape index: {}]
  %s4 = inlined_call_operand.hbm [shape: f32[2,4,256], index: 4, kind: output, shape index: {}]
  %s5 = sld [smem:[#allocation0]]
  $region65: #{tpu_custom_call.1} parent=0
    _
  %s7 = ssub.s32 1, %s5
  %s8 = scalar_select 0, %s7, %s5
  $region1: #{tpu_custom_call.1} parent=0
    #allocation3 [shape = 'u8[4096]{0}', space=vmem, size = 0x1000, scoped, tag = 'input window, operand 0']
    #allocation4 [shape = 's32[2]{0}', space=sflag, size = 0x8, scoped, tag = 'scoped memory for tpu_custom_call.1']
    #allocation5 [shape = 's32[2]{0}', space=sflag, size = 0x8, scoped, tag = 'scoped memory for tpu_custom_call.1']
    #allocation6 [shape = 'u8[65536]{0}', space=vmem, size = 0x10000, scoped, tag = 'input window, operand 3, single buffered']
    #allocation7 [shape = 's32[1]{0}', space=sflag, size = 0x4, scoped, tag = 'scoped memory for tpu_custom_call.1']
    #allocation8 [shape = 'u8[8192]{0}', space=vmem, size = 0x2000, scoped, tag = 'output window, operand 0']
    %9 = vsyncpa [#allocation4], 0
    %s10 = scalar_lea.sflag [#allocation4], 1
    %11 = vsyncpa %s10, 0
    %12 = vsyncpa [#allocation7], 0
    %13 = vsyncpa [#allocation5], 0
    %s14 = scalar_lea.sflag [#allocation5], 1
    %15 = vsyncpa %s14, 0
    loop: start=0, step=1, limit=4
    $region2: #{tpu_custom_call.1} parent=1 // loop_pre_header
      _
    $region3: #{tpu_custom_call.1} parent=1 // loop_header
      %s17 = sphi 0, %s21
      %p18 = scmp.ge.s32.totalorder %s17, 4
      %s24 = sphi 0, %s43
      %s25 = sphi 0, %s39
      %s26 = sphi 0, %s35
      %s27 = sphi 0, %s24
      %s28 = sphi 0, %s25
      %s29 = sphi 0, %s26
      %s30 = sphi 0, %s27
      %s31 = sphi 0, %s28
      %s32 = sphi 0, %s29
      %s48 = sphi 0, %s50
      %s51 = sphi 0, %s48
      %s52 = sphi 0, %s51
      %s68 = sphi 0, %s52
      %s74 = sphi 0, %s76
      %s77 = sphi 0, %s74
      %s78 = sphi 0, %s77
      %s94 = sphi 0, %s78
      %s100 = sphi 0, %s102
      %s103 = sphi 0, %s100
      %s104 = sphi 0, %s103
      %s120 = sphi 0, %s104
      %s126 = sphi 0, %s128
      %s129 = sphi 0, %s126
      %s130 = sphi 0, %s129
      %s146 = sphi 0, %s130
      %s154 = sphi 0, %s156
      %s157 = sphi 0, %s154
      %s158 = sphi 0, %s157
      %s174 = sphi 0, %s158
    $region4: #{tpu_custom_call.1} parent=1 // loop_header_branch
      %20 = sbr.rel (%p18) target = $region8
    $region5: #{tpu_custom_call.1} parent=1 // loop_body
      %s22 = ssub.s32 %s17, 1
      %s23 = ssub.s32 %s17, 2
      %s33 = sadd.s32 1, %s26
      %p34 = scmp.ge.s32.totalorder %s33, 1
      %s35 = scalar_select %p34, 0, %s33
      %s36 = sadd.s32 1, %s25
      %s37 = scalar_select %p34, %s36, %s25
      %p38 = scmp.ge.s32.totalorder %s37, 1
      %s39 = scalar_select %p38, 0, %s37
      %s40 = sadd.s32 1, %s24
      %s41 = scalar_select %p38, %s40, %s24
      %p42 = scmp.ge.s32.totalorder %s41, 2
      %s43 = scalar_select %p42, 0, %s41
      %s44 = ssub.s32 %s24, %s43
      %s45 = ssub.s32 %s26, %s35
      %s46 = sor.u32 %s44, %s45
      %p47 = scmp.eq.s32.totalorder %s46, 0
      %s49 = sadd.s32 %s48, 1
      %s50 = scalar_select %p47, %s48, %s49
      %p53 = pneg %p47
      %p54 = scmp.eq.s32.totalorder %s17, 1
      %p55 = por %p53, %p54
      %p56 = scmp.ne.s32.totalorder %s48, %s51
      %p57 = scmp.eq.s32.totalorder %s17, 0
      %p58 = por %p56, %p57
      %p59 = scmp.ne.s32.totalorder %s48, %s51
      %p60 = scmp.eq.s32.totalorder %s22, 1
      %p61 = por %p59, %p60
      %p62 = scmp.ne.s32.totalorder %s51, %s52
      %p63 = scmp.eq.s32.totalorder %s22, 0
      %p64 = por %p62, %p63
      %p65 = scmp.ne.s32.totalorder %s51, %s52
      %p66 = scmp.eq.s32.totalorder %s23, 1
      %p67 = por %p65, %p66
      %p69 = scmp.ne.s32.totalorder %s52, %s68
      %p70 = scmp.eq.s32.totalorder %s23, 0
      %p71 = por %p69, %p70
      %s72 = ssub.s32 %s25, %s39
      %p73 = scmp.eq.s32.totalorder %s72, 0
      %s75 = sadd.s32 %s74, 1
      %s76 = scalar_select %p73, %s74, %s75
      %p79 = pneg %p73
      %p80 = scmp.eq.s32.totalorder %s17, 1
      %p81 = por %p79, %p80
      %p82 = scmp.ne.s32.totalorder %s74, %s77
      %p83 = scmp.eq.s32.totalorder %s17, 0
      %p84 = por %p82, %p83
      %p85 = scmp.ne.s32.totalorder %s74, %s77
      %p86 = scmp.eq.s32.totalorder %s22, 1
      %p87 = por %p85, %p86
      %p88 = scmp.ne.s32.totalorder %s77, %s78
      %p89 = scmp.eq.s32.totalorder %s22, 0
      %p90 = por %p88, %p89
      %p91 = scmp.ne.s32.totalorder %s77, %s78
      %p92 = scmp.eq.s32.totalorder %s23, 1
      %p93 = por %p91, %p92
      %p95 = scmp.ne.s32.totalorder %s78, %s94
      %p96 = scmp.eq.s32.totalorder %s23, 0
      %p97 = por %p95, %p96
      %s98 = ssub.s32 %s25, %s39
      %p99 = scmp.eq.s32.totalorder %s98, 0
      %s101 = sadd.s32 %s100, 1
      %s102 = scalar_select %p99, %s100, %s101
      %p105 = pneg %p99
      %p106 = scmp.eq.s32.totalorder %s17, 1
      %p107 = por %p105, %p106
      %p108 = scmp.ne.s32.totalorder %s100, %s103
      %p109 = scmp.eq.s32.totalorder %s17, 0
      %p110 = por %p108, %p109
      %p111 = scmp.ne.s32.totalorder %s100, %s103
      %p112 = scmp.eq.s32.totalorder %s22, 1
      %p113 = por %p111, %p112
      %p114 = scmp.ne.s32.totalorder %s103, %s104
      %p115 = scmp.eq.s32.totalorder %s22, 0
      %p116 = por %p114, %p115
      %p117 = scmp.ne.s32.totalorder %s103, %s104
      %p118 = scmp.eq.s32.totalorder %s23, 1
      %p119 = por %p117, %p118
      %p121 = scmp.ne.s32.totalorder %s104, %s120
      %p122 = scmp.eq.s32.totalorder %s23, 0
      %p123 = por %p121, %p122
      %s124 = ssub.s32 %s26, %s35
      %p125 = scmp.eq.s32.totalorder %s124, 0
      %s127 = sadd.s32 %s126, 1
      %s128 = scalar_select %p125, %s126, %s127
      %p131 = pneg %p125
      %p132 = scmp.eq.s32.totalorder %s17, 1
      %p133 = por %p131, %p132
      %p134 = scmp.ne.s32.totalorder %s126, %s129
      %p135 = scmp.eq.s32.totalorder %s17, 0
      %p136 = por %p134, %p135
      %p137 = scmp.ne.s32.totalorder %s126, %s129
      %p138 = scmp.eq.s32.totalorder %s22, 1
      %p139 = por %p137, %p138
      %p140 = scmp.ne.s32.totalorder %s129, %s130
      %p141 = scmp.eq.s32.totalorder %s22, 0
      %p142 = por %p140, %p141
      %p143 = scmp.ne.s32.totalorder %s129, %s130
      %p144 = scmp.eq.s32.totalorder %s23, 1
      %p145 = por %p143, %p144
      %p147 = scmp.ne.s32.totalorder %s130, %s146
      %p148 = scmp.eq.s32.totalorder %s23, 0
      %p149 = por %p147, %p148
      %s150 = ssub.s32 %s24, %s43
      %s151 = ssub.s32 %s25, %s39
      %s152 = sor.u32 %s150, %s151
      %p153 = scmp.eq.s32.totalorder %s152, 0
      %s155 = sadd.s32 %s154, 1
      %s156 = scalar_select %p153, %s154, %s155
      %p159 = pneg %p153
      %p160 = scmp.eq.s32.totalorder %s17, 1
      %p161 = por %p159, %p160
      %p162 = scmp.ne.s32.totalorder %s154, %s157
      %p163 = scmp.eq.s32.totalorder %s17, 0
      %p164 = por %p162, %p163
      %p165 = scmp.ne.s32.totalorder %s154, %s157
      %p166 = scmp.eq.s32.totalorder %s22, 1
      %p167 = por %p165, %p166
      %p168 = scmp.ne.s32.totalorder %s157, %s158
      %p169 = scmp.eq.s32.totalorder %s22, 0
      %p170 = por %p168, %p169
      %p171 = scmp.ne.s32.totalorder %s157, %s158
      %p172 = scmp.eq.s32.totalorder %s23, 1
      %p173 = por %p171, %p172
      %p175 = scmp.ne.s32.totalorder %s158, %s174
      %p176 = scmp.eq.s32.totalorder %s23, 0
      %p177 = por %p175, %p176
      %p178 = scmp.le.s32.totalorder 1, %s17
      %p179 = scmp.lt.s32.totalorder %s17, 3
      %p180 = pnand %p178, %p179
      %p181 = pneg %p180
      // Predicated region
      $region9: #{tpu_custom_call.1} parent=5 // pred_check
        _
      $region10: #{tpu_custom_call.1} parent=5 // pred_check_branch
        %183 = sbr.rel (%p180) target = $region12
      $region11: #{tpu_custom_call.1} parent=5 // pred_region
        %s184 = ssub.s32 %s17, 1
        // Predicated region
        $region13: #{tpu_custom_call.1} parent=11 // pred_check
          %p185 = pneg %p90
        $region14: #{tpu_custom_call.1} parent=11 // pred_check_branch
          %187 = sbr.rel (%p185) target = $region16
        $region15: #{tpu_custom_call.1} parent=11 // pred_region
          %p188 = scmp.lt.s32.totalorder %s28, 0
          %s189 = scalar_select %p188, %s28, 0
          %s190 = smul.addr %s189, 4
          %s191 = scalar_lea.vmem %s1, %s190
        $region16: #{tpu_custom_call.1} parent=11 // pred_fallthru
          _
        // Predicated region
        $region17: #{tpu_custom_call.1} parent=11 // pred_check
          %p192 = pneg %p116
        $region18: #{tpu_custom_call.1} parent=11 // pred_check_branch
          %194 = sbr.rel (%p192) target = $region20
        $region19: #{tpu_custom_call.1} parent=11 // pred_region
          %p195 = scmp.lt.s32.totalorder %s28, 0
          %s196 = scalar_select %p195, %s28, 0
          %s197 = smul.addr %s196, 4
          %s198 = scalar_lea.vmem %s2, %s197
        $region20: #{tpu_custom_call.1} parent=11 // pred_fallthru
          _
        // Predicated region
        $region21: #{tpu_custom_call.1} parent=11 // pred_check
          %p199 = pneg %p142
        $region22: #{tpu_custom_call.1} parent=11 // pred_check_branch
          %201 = sbr.rel (%p199) target = $region24
        $region23: #{tpu_custom_call.1} parent=11 // pred_region
          %s202 = smul.u32 8, %s29
          %204 = vsyncadd [#allocation7], 0
          %s205 = smul.addr %s202, 2
          %s206 = smul.addr %s205, 8
          %s207 = scalar_lea.hbm %s3, %s206
          %s208 = sshll.u32 %s207, 4
          %s209 = int_to_ptr.hbm [resolvable:$true] %s208
          %s210 = sshll.u32 [#allocation6], 4
          %s211 = int_to_ptr.vmem [resolvable:$true] %s210
          %216 = dma.hbm_to_vmem [thread:$0]  %s209, 2048, %s211, [#allocation7], 256, 256, 16
        $region24: #{tpu_custom_call.1} parent=11 // pred_fallthru
          _
      $region12: #{tpu_custom_call.1} parent=5 // pred_fallthru
        _
      %p217 = scmp.lt.s32.totalorder %s17, 2
      // Predicated region
      $region25: #{tpu_custom_call.1} parent=5 // pred_check
        %p218 = pneg %p217
      $region26: #{tpu_custom_call.1} parent=5 // pred_check_branch
        %220 = sbr.rel (%p218) target = $region28
      $region27: #{tpu_custom_call.1} parent=5 // pred_region
        // Predicated region
        $region29: #{tpu_custom_call.1} parent=27 // pred_check
          %p221 = pneg %p58
        $region30: #{tpu_custom_call.1} parent=27 // pred_check_branch
          %223 = sbr.rel (%p221) target = $region32
        $region31: #{tpu_custom_call.1} parent=27 // pred_region
          %s224 = sand.u32 %s48, 1
          %s225 = scalar_lea.sflag [#allocation4], %s224
          %s226 = sand.u32 %s48, 1
          %s227 = smul.addr %s226, 4
          %s228 = scalar_lea.vmem [#allocation3], %s227
          %230 = vsyncadd %s225, 0
          %s231 = sadd.s32 %s26, %s24
          %s232 = smul.addr %s231, 4
          %s233 = scalar_lea.hbm %s0, %s232
          %s235 = sshll.u32 %s233, 4
          %s236 = int_to_ptr.hbm [resolvable:$true] %s235
          %s237 = sshll.u32 %s228, 4
          %s238 = int_to_ptr.vmem [resolvable:$true] %s237
          %240 = dma.hbm_to_vmem [thread:$0]  %s236, 64, %s238, %s225
        $region32: #{tpu_custom_call.1} parent=27 // pred_fallthru
          _
      $region28: #{tpu_custom_call.1} parent=5 // pred_fallthru
        _
      %p241 = scmp.le.s32.totalorder 1, %s17
      %p242 = scmp.lt.s32.totalorder %s17, 3
      %p243 = pnand %p241, %p242
      %p244 = pneg %p243
      // Predicated region
      $region33: #{tpu_custom_call.1} parent=5 // pred_check
        _
      $region34: #{tpu_custom_call.1} parent=5 // pred_check_branch
        %246 = sbr.rel (%p243) target = $region36
      $region35: #{tpu_custom_call.1} parent=5 // pred_region
        %s247 = ssub.s32 %s17, 1
        %s248 = sand.u32 %s51, 1
        %s249 = scalar_lea.sflag [#allocation4], %s248
        %s250 = sand.u32 %s51, 1
        %s251 = smul.addr %s250, 4
        %s252 = scalar_lea.vmem [#allocation3], %s251
        // Predicated region
        $region37: #{tpu_custom_call.1} parent=35 // pred_check
          %p253 = pneg %p64
        $region38: #{tpu_custom_call.1} parent=35 // pred_check_branch
          %255 = sbr.rel (%p253) target = $region40
        $region39: #{tpu_custom_call.1} parent=35 // pred_region
          %257 = dma.done %s249, 64
        $region40: #{tpu_custom_call.1} parent=35 // pred_fallthru
          _
        // Predicated region
        $region41: #{tpu_custom_call.1} parent=35 // pred_check
          %p258 = pneg %p142
        $region42: #{tpu_custom_call.1} parent=35 // pred_check_branch
          %260 = sbr.rel (%p258) target = $region44
        $region43: #{tpu_custom_call.1} parent=35 // pred_region
          %262 = dma.done [#allocation7], 2048
        $region44: #{tpu_custom_call.1} parent=35 // pred_fallthru
          _
        %s263 = sand.u32 %s51, 1
        %s264 = scalar_lea.sflag [#allocation4], %s263
        %s265 = sand.u32 %s51, 1
        %s266 = smul.addr %s265, 4
        %s267 = scalar_lea.vmem [#allocation3], %s266
        %p268 = pneg %p64
        %p269 = pneg %p61
        %p270 = scmp.lt.s32.totalorder %s28, 0
        %s271 = scalar_select %p270, %s28, 0
        %s272 = smul.addr %s271, 4
        %s273 = scalar_lea.vmem %s1, %s272
        %p274 = pneg %p90
        %p275 = pneg %p87
        %p276 = scmp.lt.s32.totalorder %s28, 0
        %s277 = scalar_select %p276, %s28, 0
        %s278 = smul.addr %s277, 4
        %s279 = scalar_lea.vmem %s2, %s278
        %p280 = pneg %p116
        %p281 = pneg %p113
        %p282 = pneg %p142
        %p283 = pneg %p139
        %p284 = pneg %p170
        %p285 = pneg %p167
        %s286 = sand.u32 %s157, 1
        %s287 = scalar_lea.sflag [#allocation5], %s286
        %s288 = sand.u32 %s157, 1
        %s289 = smul.addr %s288, 8
        %s290 = scalar_lea.vmem [#allocation8], %s289
        %p291 = scmp.lt.s32.totalorder %s28, 0
        %s292 = scalar_select %p291, %s28, 0
        %s293 = smul.addr %s292, 4
        %s294 = scalar_lea.vmem %s1, %s293
        %p295 = scmp.lt.s32.totalorder %s28, 0
        %s296 = scalar_select %p295, %s28, 0
        %s297 = smul.addr %s296, 4
        %s298 = scalar_lea.vmem %s2, %s297
        %s299 = smul.u32 8, %s29
        %p300 = scmp.eq.s32.totalorder %s29, 0
        // Predicated region
        $region45: #{tpu_custom_call.1} parent=35 // pred_check
          %p301 = pneg %p300
        $region46: #{tpu_custom_call.1} parent=35 // pred_check_branch
          %303 = sbr.rel (%p301) target = $region48
        $region47: #{tpu_custom_call.1} parent=35 // pred_region
          %304 = vst [vmem:[#allocation2] sm:$0xff] 0.0
        $region48: #{tpu_custom_call.1} parent=35 // pred_fallthru
          _
        %v305 = vld [vmem:[%s294] sm:$0xf]
        %v306 = vld [vmem:[%s252] sm:$0xf]
        %v307 = vld [vmem:[%s298] sm:$0xf]
        %309 = vset.pattern.permute.xlu0 0
        %310 = vperm.xlu0 %309, %v307
        %v311 = vpop.permute.xlu0 %310
        %vm313 = vcmask 31744
        %v315 = vsel %vm313, %v305, 0
        %vm317 = vcmask 1043456
        %v319 = vsel %vm317, %v306, 0
        %321 = vmatpush.msra.mxu0 0.0
        %322 = vmatpush.msra.mxu0 0.0
        %323 = vmatpush.msra.mxu0 0.0
        %324 = vmatpush.msra.mxu0 0.0
        %325 = vmatpush.msra.mxu0 0.0
        %326 = vmatpush.msra.mxu0 0.0
        %327 = vmatpush.msra.mxu0 0.0
        %328 = vmatpush.msra.mxu0 0.0
        %329 = vmatpush.msra.mxu0 0.0
        %330 = vmatpush.msra.mxu0 0.0
        %331 = vmatpush.msra.mxu0 0.0
        %332 = vmatpush.msra.mxu0 0.0
        %333 = vmatpush.msra.mxu0 0.0
        %334 = vmatpush.msra.mxu0 0.0
        %335 = vmatpush.msra.mxu0 0.0
        %336 = vmatpush.msra.mxu0 %v319
        %337 = vmatmul.f32.gmra.mxu0 %v315
        %v338 = vpop.f32.mrf.mxu0
        %v339 = vadd.f32 %v311, %v338
        %340 = vdwg.mxu0
        %v341 = vld [vmem:[#allocation2] sm:$0xff]
        %v342 = vld [vmem:[#allocation6] sm:$0xff]
        %v343 = vld [vmem:[#allocation6 + $0x8] sm:$0xff]
        %v344 = vld [vmem:[#allocation6 + $0x10] sm:$0xff]
        %v345 = vld [vmem:[#allocation6 + $0x18] sm:$0xff]
        %v346 = vld [vmem:[#allocation6 + $0x20] sm:$0xff]
        %v347 = vld [vmem:[#allocation6 + $0x28] sm:$0xff]
        %v348 = vld [vmem:[#allocation6 + $0x30] sm:$0xff]
        %v349 = vld [vmem:[#allocation6 + $0x38] sm:$0xff]
        %v350 = vld [vmem:[#allocation6 + $0x40] sm:$0xff]
        %v351 = vld [vmem:[#allocation6 + $0x48] sm:$0xff]
        %v352 = vld [vmem:[#allocation6 + $0x50] sm:$0xff]
        %v353 = vld [vmem:[#allocation6 + $0x58] sm:$0xff]
        %v354 = vld [vmem:[#allocation6 + $0x60] sm:$0xff]
        %v355 = vld [vmem:[#allocation6 + $0x68] sm:$0xff]
        %v356 = vld [vmem:[#allocation6 + $0x70] sm:$0xff]
        %v357 = vld [vmem:[#allocation6 + $0x78] sm:$0xff]
        %vm358 = vcmask 523264
        %v360 = vsel %vm358, %v339, 0
        %362 = vmatpush.msra.mxu0 0.0
        %363 = vmatpush.msra.mxu0 0.0
        %364 = vmatpush.msra.mxu0 0.0
        %365 = vmatpush.msra.mxu0 0.0
        %366 = vmatpush.msra.mxu0 0.0
        %367 = vmatpush.msra.mxu0 0.0
        %368 = vmatpush.msra.mxu0 0.0
        %369 = vmatpush.msra.mxu0 0.0
        %370 = vmatpush.msra.mxu0 %v356
        %371 = vmatpush.msra.mxu0 %v354
        %372 = vmatpush.msra.mxu0 %v352
        %373 = vmatpush.msra.mxu0 %v350
        %374 = vmatpush.msra.mxu0 %v348
        %375 = vmatpush.msra.mxu0 %v346
        %376 = vmatpush.msra.mxu0 %v344
        %377 = vmatpush.msra.mxu0 %v342
        %378 = vmatmul.f32.gmra.mxu0 %v360
        %v379 = vpop.f32.mrf.mxu0
        %v380 = vadd.f32 0.0, %v379
        %381 = vdwg.mxu0
        %382 = vmatpush.msra.mxu0 0.0
        %383 = vmatpush.msra.mxu0 0.0
        %384 = vmatpush.msra.mxu0 0.0
        %385 = vmatpush.msra.mxu0 0.0
        %386 = vmatpush.msra.mxu0 0.0
        %387 = vmatpush.msra.mxu0 0.0
        %388 = vmatpush.msra.mxu0 0.0
        %389 = vmatpush.msra.mxu0 0.0
        %390 = vmatpush.msra.mxu0 %v357
        %391 = vmatpush.msra.mxu0 %v355
        %392 = vmatpush.msra.mxu0 %v353
        %393 = vmatpush.msra.mxu0 %v351
        %394 = vmatpush.msra.mxu0 %v349
        %395 = vmatpush.msra.mxu0 %v347
        %396 = vmatpush.msra.mxu0 %v345
        %397 = vmatpush.msra.mxu0 %v343
        %398 = vmatmul.f32.gmra.mxu0 %v360
        %v399 = vpop.f32.mrf.mxu0
        %v400 = vadd.f32 0.0, %v399
        %401 = vdwg.mxu0
        %v404 = vrot.slane %v400, 4
        %v405 = vsel %vm317, %v380, %v404
        %v407 = vadd.f32 %v341, %v405
        %408 = vst [vmem:[#allocation2] sm:$0xff] %v407
        // Predicated region
        $region49: #{tpu_custom_call.1} parent=35 // pred_check
          %p409 = pneg %p300
        $region50: #{tpu_custom_call.1} parent=35 // pred_check_branch
          %411 = sbr.rel (%p409) target = $region52
        $region51: #{tpu_custom_call.1} parent=35 // pred_region
          %v412 = vld [vmem:[#allocation2] sm:$0xff]
          %413 = vst [vmem:[%s290] sm:$0xff] %v412
        $region52: #{tpu_custom_call.1} parent=35 // pred_fallthru
          _
        %s414 = sand.u32 %s157, 1
        %s415 = scalar_lea.sflag [#allocation5], %s414
        %s416 = sand.u32 %s157, 1
        %s417 = smul.addr %s416, 8
        %s418 = scalar_lea.vmem [#allocation8], %s417
        // Predicated region
        $region53: #{tpu_custom_call.1} parent=35 // pred_check
          %p419 = pneg %p167
        $region54: #{tpu_custom_call.1} parent=35 // pred_check_branch
          %421 = sbr.rel (%p419) target = $region56
        $region55: #{tpu_custom_call.1} parent=35 // pred_region
          %423 = vsyncadd %s415, 0
          %s424 = smul.addr %s28, 2
          %s425 = smul.addr %s27, 2
          %s426 = sadd.s32 %s424, %s425
          %s427 = smul.addr %s426, 4
          %s428 = scalar_lea.hbm %s4, %s427
          %s430 = sshll.u32 %s418, 4
          %s431 = int_to_ptr.vmem [resolvable:$true] %s430
          %s432 = sshll.u32 %s428, 4
          %s433 = int_to_ptr.hbm [resolvable:$true] %s432
          %435 = dma.vmem_to_hbm [thread:$0]  %s431, 128, %s433, %s415
        $region56: #{tpu_custom_call.1} parent=35 // pred_fallthru
          _
      $region36: #{tpu_custom_call.1} parent=5 // pred_fallthru
        _
      %p436 = scmp.le.s32.totalorder 2, %s17
      // Predicated region
      $region57: #{tpu_custom_call.1} parent=5 // pred_check
        %p437 = pneg %p436
      $region58: #{tpu_custom_call.1} parent=5 // pred_check_branch
        %439 = sbr.rel (%p437) target = $region60
      $region59: #{tpu_custom_call.1} parent=5 // pred_region
        %s440 = ssub.s32 %s17, 2
        // Predicated region
        $region61: #{tpu_custom_call.1} parent=59 // pred_check
          %p441 = pneg %p173
        $region62: #{tpu_custom_call.1} parent=59 // pred_check_branch
          %443 = sbr.rel (%p441) target = $region64
        $region63: #{tpu_custom_call.1} parent=59 // pred_region
          %s444 = sand.u32 %s158, 1
          %s445 = scalar_lea.sflag [#allocation5], %s444
          %s446 = sand.u32 %s158, 1
          %s447 = smul.addr %s446, 8
          %s448 = scalar_lea.vmem [#allocation8], %s447
          %450 = dma.done %s445, 128
        $region64: #{tpu_custom_call.1} parent=59 // pred_fallthru
          _
      $region60: #{tpu_custom_call.1} parent=5 // pred_fallthru
        _
    $region6: #{tpu_custom_call.1} parent=1 // loop_footer
      %s21 = sadd.s32 1, %s17
    $region7: #{tpu_custom_call.1} parent=1 // loop_footer_branch
      %16 = sbr.rel target = $region3
    $region8: #{tpu_custom_call.1} parent=1 // loop_exit
      _
    %451 = vsyncpa [#allocation4], 1
    %s452 = scalar_lea.sflag [#allocation4], 1
    %453 = vsyncpa %s452, 1
    %454 = vsyncpa [#allocation7], 1
    %455 = vsyncpa [#allocation5], 1
    %s456 = scalar_lea.sflag [#allocation5], 1
    %457 = vsyncpa %s456, 1

</llo_original>
